<compile_context>
chip_gen: v7x
topology: tpu7x:2x2x1
jax: 0.10.0
libtpu: 0.0.40
codegen_flags: <defaults>
</compile_context>

<pallas_src>
import functools

import numpy as np
import jax
import jax.numpy as jnp
from jax.experimental import pallas as pl
from jax.experimental.pallas import tpu as pltpu

LN_EPS = 1e-5
_SQRT_2_OVER_PI = 0.7978845608028654
_FALLBACK_VMEM_LIMIT = 48 * 1024 * 1024

# Constant-index (weight / per-channel) blocks never change across the row grid,
# so single-buffering halves their VMEM footprint (matters most on v7x's 64 MiB).
# Off by default only because pipeline_mode support varies across jax releases.
USE_SINGLE_BUFFERED_WEIGHTS = False


# ---------------------------------------------------------------------------
# small helpers
# ---------------------------------------------------------------------------
def _round_up(n, m):
    return ((n + m - 1) // m) * m


def _row_tile(rows, tile_rows, min_steps=2):
    """Row tile (multiple of 8) and padded row count; keeps >= min_steps grid
    steps when possible so both v7x TensorCores get work."""
    rows8 = _round_up(max(rows, 1), 8)
    tile = min(max(8, _round_up(tile_rows, 8)), rows8)
    if min_steps > 1 and rows8 > 8:
        tile = min(tile, _round_up(pl.cdiv(rows8, min_steps), 8))
    tile = max(tile, 8)
    return tile, _round_up(rows, tile)


def _pad_rows(x2d, padded_rows):
    rows = x2d.shape[0]
    if padded_rows == rows:
        return x2d
    return jnp.pad(x2d, ((0, padded_rows - rows), (0, 0)))


def _heads_per_group(num_heads, head_dim):
    """Heads per attention grid step so the block's last dim is >=128 lanes
    (when C allows) or the full feature dim."""
    if head_dim >= 128 and head_dim % 128 == 0:
        return 1
    if head_dim < 128 and 128 % head_dim == 0:
        g = 128 // head_dim
        if g < num_heads and num_heads % g == 0:
            return g
    return num_heads


def _layernorm_f32(x, gamma, beta):
    mean = jnp.mean(x, axis=-1, keepdims=True)
    centered = x - mean
    var = jnp.mean(centered * centered, axis=-1, keepdims=True)
    return centered * jax.lax.rsqrt(var + LN_EPS) * gamma + beta


def _gelu_tanh(x):
    # TODO(synk): PyTorch nn.GELU() default is the exact erf form; the tanh
    # approximation is used for guaranteed Mosaic lowering (reference matches).
    return 0.5 * x * (1.0 + jnp.tanh(_SQRT_2_OVER_PI * (x + 0.044715 * x * x * x)))


@functools.lru_cache(maxsize=None)
def _vmem_limit_bytes():
    """Generation-aware scoped-VMEM cap: ~112 MiB on v5e/v6e (128 MiB physical),
    ~56 MiB on v7x (64 MiB physical); falls back if the query is unavailable."""
    try:
        cap = int(pltpu.get_tpu_info().vmem_capacity_bytes)
        return max(32 * 1024 * 1024, (cap * 7) // 8)
    except Exception:  # pragma: no cover - non-TPU / older jax fallback
        return _FALLBACK_VMEM_LIMIT


def _compiler_params(semantics):
    return pltpu.CompilerParams(dimension_semantics=semantics,
                                vmem_limit_bytes=_vmem_limit_bytes())


def _const_spec(shape):
    """BlockSpec for a block whose index never changes across the grid."""
    ndim = len(shape)
    index_map = lambda *args: (0,) * ndim
    if USE_SINGLE_BUFFERED_WEIGHTS:
        return pl.BlockSpec(shape, index_map, pipeline_mode=pl.Buffered(1))
    return pl.BlockSpec(shape, index_map)


# ---------------------------------------------------------------------------
# kernel 1: LayerNorm -> QKV Linear, split into q / k / v outputs
# ---------------------------------------------------------------------------
def _ln_qkv_kernel(x_ref, lnv_ref, b_ref, w_ref, q_ref, k_ref, v_ref):
    c = x_ref.shape[-1]
    x = x_ref[...].astype(jnp.float32)
    vecs = lnv_ref[...].astype(jnp.float32)            # (2, C): [gamma; beta]
    y = _layernorm_f32(x, vecs[0:1, :], vecs[1:2, :])
    acc = jnp.dot(y.astype(w_ref.dtype), w_ref[...],
                  preferred_element_type=jnp.float32)
    acc = acc + b_ref[...].astype(jnp.float32)
    # 3C columns are ordered (q | k | v), each head-major -> direct split, no
    # XLA transpose needed downstream.
    q_ref[...] = acc[:, 0 * c:1 * c].astype(q_ref.dtype)
    k_ref[...] = acc[:, 1 * c:2 * c].astype(k_ref.dtype)
    v_ref[...] = acc[:, 2 * c:3 * c].astype(v_ref.dtype)


def ln_qkv(x2d, gamma, beta, w, b, *, tile_rows=256):
    rows, c = x2d.shape
    tile, rows_p = _row_tile(rows, tile_rows)
    xp = _pad_rows(x2d, rows_p)
    lnv = jnp.concatenate([gamma.reshape(1, c), beta.reshape(1, c)], axis=0)
    bias = b.reshape(1, 3 * c)

    row_spec = pl.BlockSpec((tile, c), lambda i: (i, 0))
    out_sds = jax.ShapeDtypeStruct((rows_p, c), x2d.dtype)
    q2, k2, v2 = pl.pallas_call(
        _ln_qkv_kernel,
        out_shape=(out_sds, out_sds, out_sds),
        grid_spec=pltpu.PrefetchScalarGridSpec(
            num_scalar_prefetch=0,
            grid=(rows_p // tile,),
            in_specs=[
                row_spec,
                _const_spec((2, c)),
                _const_spec((1, 3 * c)),
                _const_spec((c, 3 * c)),
            ],
            out_specs=(row_spec, row_spec, row_spec),
        ),
        compiler_params=_compiler_params(("parallel",)),
    )(xp, lnv, bias, w)
    return q2[:rows], k2[:rows], v2[:rows]


# ---------------------------------------------------------------------------
# kernel 2: relative attention, one (head_group, batch) tile per grid step
# ---------------------------------------------------------------------------
def _attention_kernel(q_ref, k_ref, v_ref, bias_ref, o_ref, *, heads, scale):
    hd = q_ref.shape[-1] // heads
    # Fold the softmax scale into q: O(N*hd) multiplies instead of O(N^2).
    q = q_ref[...] * jnp.asarray(scale, q_ref.dtype)
    k = k_ref[...]
    v = v_ref[...]
    for h in range(heads):          # unrolled; each head is an independent MXU matmul
        lo, hi = h * hd, (h + 1) * hd
        s = jax.lax.dot_general(q[:, lo:hi], k[:, lo:hi],
                                (((1,), (1,)), ((), ())),
                                preferred_element_type=jnp.float32)      # (N, N)
        s = s + bias_ref[h].astype(jnp.float32)
        s = s - jnp.max(s, axis=-1, keepdims=True)
        p = jnp.exp(s)
        l = jnp.sum(p, axis=-1, keepdims=True)
        o = jnp.dot(p.astype(v.dtype), v[:, lo:hi],
                    preferred_element_type=jnp.float32)                  # (N, hd)
        # Normalize the (N, hd) PV output instead of the (N, N) probabilities.
        o_ref[:, lo:hi] = (o * pl.reciprocal(l)).astype(o_ref.dtype)


def relative_attention(q, k, v, rel_bias, scale, *, num_heads):
    """q, k, v: (B, N, C) head-major along C; rel_bias: (H, N, N). Output (B, N, C)."""
    b, n, c = q.shape
    hd = c // num_heads
    g = _heads_per_group(num_heads, hd)
    n_groups = num_heads // g
    gc = g * hd

    qkv_spec = pl.BlockSpec((None, n, gc), lambda hg, bi: (bi, 0, hg))
    bias_spec = pl.BlockSpec((g, n, n), lambda hg, bi: (hg, 0, 0))
    kernel = functools.partial(_attention_kernel, heads=g, scale=scale)
    return pl.pallas_call(
        kernel,
        out_shape=jax.ShapeDtypeStruct((b, n, c), q.dtype),
        grid_spec=pltpu.PrefetchScalarGridSpec(
            num_scalar_prefetch=0,
            # head-group OUTER, batch INNER -> bias block index constant across
            # consecutive grid steps, so Pallas skips its re-DMA.
            grid=(n_groups, b),
            in_specs=[qkv_spec, qkv_spec, qkv_spec, bias_spec],
            out_specs=qkv_spec,
        ),
        compiler_params=_compiler_params(("parallel", "parallel")),
    )(q, k, v, rel_bias)


# ---------------------------------------------------------------------------
# kernel 3: out-proj + residual + LayerNorm2 + fc1 -> GELU -> fc2 + residual
# ---------------------------------------------------------------------------
def _proj_mlp_kernel(ctx_ref, res_ref, cvec_ref, b1_ref, wp_ref, w1_ref, w2_ref,
                     o_ref):
    vecs = cvec_ref[...].astype(jnp.float32)   # (4, C): [proj_b; ln2_g; ln2_b; fc2_b]
    x = jnp.dot(ctx_ref[...].astype(wp_ref.dtype), wp_ref[...],
                preferred_element_type=jnp.float32)
    x = x + vecs[0:1, :] + res_ref[...].astype(jnp.float32)   # new residual stream
    y = _layernorm_f32(x, vecs[1:2, :], vecs[2:3, :])
    h = jnp.dot(y.astype(w1_ref.dtype), w1_ref[...],
                preferred_element_type=jnp.float32)
    h = _gelu_tanh(h + b1_ref[...].astype(jnp.float32))
    o = jnp.dot(h.astype(w2_ref.dtype), w2_ref[...],
                preferred_element_type=jnp.float32)
    o = o + vecs[3:4, :] + x
    o_ref[...] = o.astype(o_ref.dtype)


def proj_mlp_residual(ctx2d, res2d, w_proj, b_proj, ln2_g, ln2_b,
                      w1, b1, w2, b2, *, tile_rows=256):
    rows, c = ctx2d.shape
    hidden = w1.shape[1]
    tile, rows_p = _row_tile(rows, tile_rows)
    ctx_p = _pad_rows(ctx2d, rows_p)
    res_p = _pad_rows(res2d, rows_p)
    cvec = jnp.concatenate([b_proj.reshape(1, c), ln2_g.reshape(1, c),
                            ln2_b.reshape(1, c), b2.reshape(1, c)], axis=0)
    b1r = b1.reshape(1, hidden)

    row_spec = pl.BlockSpec((tile, c), lambda i: (i, 0))
    out = pl.pallas_call(
        _proj_mlp_kernel,
        out_shape=jax.ShapeDtypeStruct((rows_p, c), res2d.dtype),
        grid_spec=pltpu.PrefetchScalarGridSpec(
            num_scalar_prefetch=0,
            grid=(rows_p // tile,),
            in_specs=[
                row_spec, row_spec,
                _const_spec((4, c)),
                _const_spec((1, hidden)),
                _const_spec((c, c)),
                _const_spec((c, hidden)),
                _const_spec((hidden, c)),
            ],
            out_specs=row_spec,
        ),
        compiler_params=_compiler_params(("parallel",)),
    )(ctx_p, res_p, cvec, b1r, w_proj, w1, w2)
    return out[:rows]


# ---------------------------------------------------------------------------
# MHSABlock wrapper (stride=1 path; patch_embed is None in that configuration)
# ---------------------------------------------------------------------------
def make_relative_position_index(img_size, extra_token_num):
    hh, ww = img_size
    coords = np.stack(np.meshgrid(np.arange(hh), np.arange(ww), indexing="ij"))
    coords_flatten = coords.reshape(2, -1)
    rel = coords_flatten[:, :, None] - coords_flatten[:, None, :]
    rel = rel.transpose(1, 2, 0).astype(np.int64)
    rel[:, :, 0] += hh - 1
    rel[:, :, 1] += ww - 1
    rel[:, :, 0] *= 2 * ww - 1
    idx = rel.sum(-1)
    idx = np.pad(idx, ((extra_token_num, 0), (extra_token_num, 0)),
                 constant_values=0)
    return jnp.asarray(idx, dtype=jnp.int32)


def precompute_relative_bias(params, n):
    """Gather + transpose the relative-position bias once per parameter set.
    Returned in the table's dtype (bf16 tables halve the bias HBM stream)."""
    num_heads = params["rel_pos_table"].shape[-1]
    idx = params["rel_pos_index"].reshape(-1)
    bias = jnp.take(params["rel_pos_table"], idx, axis=0).reshape(n, n, num_heads)
    return jnp.transpose(bias, (2, 0, 1))                  # (H, N, N)


def make_mhsa_params(key, dim, num_heads, img_size, extra_token_num=1,
                     mlp_ratio=4.0, qkv_bias=False, dtype=jnp.float32):
    hidden = int(dim * mlp_ratio)
    num_rel = (2 * img_size[0] - 1) * (2 * img_size[1] - 1) + 1
    ks = jax.random.split(key, 8)
    s_in = 1.0 / np.sqrt(dim)
    s_hid = 1.0 / np.sqrt(hidden)
    params = {
        "ln1_g": jnp.ones((dim,), dtype),
        "ln1_b": jnp.zeros((dim,), dtype),
        "w_qkv": (jax.random.normal(ks[0], (dim, 3 * dim)) * s_in).astype(dtype),
        "b_qkv": ((jax.random.normal(ks[1], (3 * dim,)) * 0.01).astype(dtype)
                  if qkv_bias else jnp.zeros((3 * dim,), dtype)),
        "rel_pos_table": (jax.random.normal(ks[2], (num_rel, num_heads)) * 0.02).astype(dtype),
        "w_proj": (jax.random.normal(ks[3], (dim, dim)) * s_in).astype(dtype),
        "b_proj": (jax.random.normal(ks[4], (dim,)) * 0.01).astype(dtype),
        "ln2_g": jnp.ones((dim,), dtype),
        "ln2_b": jnp.zeros((dim,), dtype),
        "w_fc1": (jax.random.normal(ks[5], (dim, hidden)) * s_in).astype(dtype),
        "b_fc1": (jax.random.normal(ks[6], (hidden,)) * 0.01).astype(dtype),
        "w_fc2": (jax.random.normal(ks[7], (hidden, dim)) * s_hid).astype(dtype),
        "b_fc2": jnp.zeros((dim,), dtype),
        "rel_pos_index": make_relative_position_index(img_size, extra_token_num),
    }
    return params


def mhsa_block(x, params, *, num_heads, tile_rows=256, rel_bias=None):
    """x: (B, N, C) with N = img_h*img_w + extra_token_num."""
    b, n, c = x.shape
    hd = c // num_heads
    scale = hd ** -0.5

    if rel_bias is None:
        rel_bias = precompute_relative_bias(params, n)

    x2d = x.reshape(b * n, c)

    # --- attention branch (no activation transposes anywhere) ----------------
    q2, k2, v2 = ln_qkv(x2d, params["ln1_g"], params["ln1_b"],
                        params["w_qkv"], params["b_qkv"], tile_rows=tile_rows)
    q = q2.reshape(b, n, c)
    k = k2.reshape(b, n, c)
    v = v2.reshape(b, n, c)

    ctx = relative_attention(q, k, v, rel_bias, scale, num_heads=num_heads)
    ctx2d = ctx.reshape(b * n, c)

    # --- fused out-proj + residual + LN2 + MLP + residual ---------------------
    out = proj_mlp_residual(ctx2d, x2d, params["w_proj"], params["b_proj"],
                            params["ln2_g"], params["ln2_b"],
                            params["w_fc1"], params["b_fc1"],
                            params["w_fc2"], params["b_fc2"],
                            tile_rows=tile_rows)
    return out.reshape(b, n, c)


# ---------------------------------------------------------------------------
# pure-JAX reference of the PyTorch forward (stride=1, dropout/droppath = id)
# ---------------------------------------------------------------------------
def mhsa_ref(x, params, *, num_heads):
    b, n, c = x.shape
    hd = c // num_heads
    scale = hd ** -0.5

    def ln(y, g, be):
        m = jnp.mean(y, -1, keepdims=True)
        v = jnp.mean((y - m) ** 2, -1, keepdims=True)
        return (y - m) / jnp.sqrt(v + LN_EPS) * g + be

    y = ln(x, params["ln1_g"], params["ln1_b"])
    qkv = y @ params["w_qkv"] + params["b_qkv"]
    qkv = qkv.reshape(b, n, 3, num_heads, hd).transpose(2, 0, 3, 1, 4)
    q, k, v = qkv[0] * scale, qkv[1], qkv[2]
    attn = q @ jnp.swapaxes(k, -2, -1)
    idx = params["rel_pos_index"].reshape(-1)
    bias = jnp.take(params["rel_pos_table"], idx, axis=0).reshape(n, n, num_heads)
    attn = attn + jnp.transpose(bias, (2, 0, 1))[None]
    attn = jax.nn.softmax(attn, axis=-1)
    ctx = (attn @ v).transpose(0, 2, 1, 3).reshape(b, n, c)
    ctx = ctx @ params["w_proj"] + params["b_proj"]
    x = x + ctx
    y = ln(x, params["ln2_g"], params["ln2_b"])
    h = _gelu_tanh(y @ params["w_fc1"] + params["b_fc1"])
    h = h @ params["w_fc2"] + params["b_fc2"]
    return x + h


if __name__ == "__main__":
    key = jax.random.PRNGKey(0)
    k_x, k_p = jax.random.split(key)

    batch = 2
    image_size = 4            # stride=1 -> img_size = (4, 4)
    extra_token_num = 1
    dim = 32                  # output_dim
    num_heads = 4             # head_dim = 8
    seq = image_size * image_size + extra_token_num   # N = 17

    params = make_mhsa_params(k_p, dim, num_heads,
                              (image_size, image_size),
                              extra_token_num=extra_token_num)
    x = jax.random.normal(k_x, (batch, seq, dim), dtype=jnp.float32)

    # bias gather/transpose done once per parameter set, not per forward call
    rel_bias = precompute_relative_bias(params, seq)

    out = mhsa_block(x, params, num_heads=num_heads, tile_rows=256,
                     rel_bias=rel_bias)
    out = jax.block_until_ready(out)

    ref = mhsa_ref(x, params, num_heads=num_heads)
    assert out.shape == x.shape
    assert jnp.allclose(out, ref, atol=1e-4, rtol=1e-4), "mismatch vs reference"

    print("KERNEL_OK")
</pallas_src>

<mosaic_0001>
module attributes {stable_mosaic.version = 11 : i64} {
  func.func @_ln_qkv_kernel(%arg0: i32, %arg1: memref<24x32xf32, #tpu.memory_space<vmem>>, %arg2: memref<2x32xf32, #tpu.memory_space<vmem>>, %arg3: memref<1x96xf32, #tpu.memory_space<vmem>>, %arg4: memref<32x96xf32, #tpu.memory_space<vmem>>, %arg5: memref<24x32xf32, #tpu.memory_space<vmem>>, %arg6: memref<24x32xf32, #tpu.memory_space<vmem>>, %arg7: memref<24x32xf32, #tpu.memory_space<vmem>>) attributes {dimension_semantics = [#tpu.dimension_semantics<parallel>], iteration_bounds = array<i64: 2>, scalar_prefetch = 0 : i64, scratch_operands = 0 : i64, tpu.core_type = #tpu.core_type<tc>, window_params = [{transform_indices = @transform_0, window_bounds = array<i64: 24, 32>}, {pipeline_mode = #tpu.pipeline_mode<synchronous>, transform_indices = @transform_1, window_bounds = array<i64: 2, 32>}, {pipeline_mode = #tpu.pipeline_mode<synchronous>, transform_indices = @transform_2, window_bounds = array<i64: 1, 96>}, {pipeline_mode = #tpu.pipeline_mode<synchronous>, transform_indices = @transform_3, window_bounds = array<i64: 32, 96>}, {transform_indices = @transform_4, window_bounds = array<i64: 24, 32>}, {transform_indices = @transform_5, window_bounds = array<i64: 24, 32>}, {transform_indices = @transform_6, window_bounds = array<i64: 24, 32>}]} {
    %c0 = arith.constant 0 : index
    %c0_0 = arith.constant 0 : index
    %0 = vector.load %arg1[%c0, %c0_0] : memref<24x32xf32, #tpu.memory_space<vmem>>, vector<24x32xf32>
    %c0_1 = arith.constant 0 : index
    %c0_2 = arith.constant 0 : index
    %1 = vector.load %arg2[%c0_1, %c0_2] : memref<2x32xf32, #tpu.memory_space<vmem>>, vector<2x32xf32>
    %2 = vector.extract_strided_slice %1 {offsets = [0, 0], sizes = [1, 32], strides = [1, 1]} : vector<2x32xf32> to vector<1x32xf32>
    %3 = vector.extract_strided_slice %1 {offsets = [1, 0], sizes = [1, 32], strides = [1, 1]} : vector<2x32xf32> to vector<1x32xf32>
    %cst = arith.constant dense<0.000000e+00> : vector<24xf32>
    %4 = vector.multi_reduction <add>, %0, %cst [1] : vector<24x32xf32> to vector<24xf32>
    %5 = vector.shape_cast %4 : vector<24xf32> to vector<24x1xf32>
    %cst_3 = arith.constant 3.200000e+01 : f32
    %6 = vector.broadcast %cst_3 : f32 to vector<24x1xf32>
    %7 = arith.divf %5, %6 : vector<24x1xf32>
    %8 = vector.broadcast %7 : vector<24x1xf32> to vector<24x32xf32>
    %9 = arith.subf %0, %8 : vector<24x32xf32>
    %10 = arith.mulf %9, %9 : vector<24x32xf32>
    %cst_4 = arith.constant dense<0.000000e+00> : vector<24xf32>
    %11 = vector.multi_reduction <add>, %10, %cst_4 [1] : vector<24x32xf32> to vector<24xf32>
    %12 = vector.shape_cast %11 : vector<24xf32> to vector<24x1xf32>
    %cst_5 = arith.constant 3.200000e+01 : f32
    %13 = vector.broadcast %cst_5 : f32 to vector<24x1xf32>
    %14 = arith.divf %12, %13 : vector<24x1xf32>
    %cst_6 = arith.constant 9.99999974E-6 : f32
    %15 = vector.broadcast %cst_6 : f32 to vector<24x1xf32>
    %16 = arith.addf %14, %15 : vector<24x1xf32>
    %17 = math.rsqrt %16 : vector<24x1xf32>
    %18 = vector.broadcast %17 : vector<24x1xf32> to vector<24x32xf32>
    %19 = arith.mulf %9, %18 : vector<24x32xf32>
    %20 = vector.broadcast %2 : vector<1x32xf32> to vector<24x32xf32>
    %21 = arith.mulf %19, %20 : vector<24x32xf32>
    %22 = vector.broadcast %3 : vector<1x32xf32> to vector<24x32xf32>
    %23 = arith.addf %21, %22 : vector<24x32xf32>
    %c0_7 = arith.constant 0 : index
    %c0_8 = arith.constant 0 : index
    %24 = vector.load %arg4[%c0_7, %c0_8] : memref<32x96xf32, #tpu.memory_space<vmem>>, vector<32x96xf32>
    %cst_9 = arith.constant dense<0.000000e+00> : vector<24x96xf32>
    %25 = tpu.matmul %23, %24, %cst_9 {dimension_numbers = #tpu.dot_dimension_numbers<[1], [0], [0], [1], [0, 0, 1, 1], [], []>} : vector<24x32xf32>, vector<32x96xf32>, vector<24x96xf32> -> vector<24x96xf32>
    %c0_10 = arith.constant 0 : index
    %c0_11 = arith.constant 0 : index
    %26 = vector.load %arg3[%c0_10, %c0_11] : memref<1x96xf32, #tpu.memory_space<vmem>>, vector<1x96xf32>
    %27 = vector.broadcast %26 : vector<1x96xf32> to vector<24x96xf32>
    %28 = arith.addf %25, %27 : vector<24x96xf32>
    %29 = vector.extract_strided_slice %28 {offsets = [0, 0], sizes = [24, 32], strides = [1, 1]} : vector<24x96xf32> to vector<24x32xf32>
    %c0_12 = arith.constant 0 : index
    %c0_13 = arith.constant 0 : index
    %30 = vector.load %arg5[%c0_12, %c0_13] : memref<24x32xf32, #tpu.memory_space<vmem>>, vector<24x32xf32>
    tpu.vector_store %arg5[%c0_12, %c0_13], %29 {strides = array<i32>} : memref<24x32xf32, #tpu.memory_space<vmem>>, vector<24x32xf32>,
    %31 = vector.extract_strided_slice %28 {offsets = [0, 32], sizes = [24, 32], strides = [1, 1]} : vector<24x96xf32> to vector<24x32xf32>
    %c0_14 = arith.constant 0 : index
    %c0_15 = arith.constant 0 : index
    %32 = vector.load %arg6[%c0_14, %c0_15] : memref<24x32xf32, #tpu.memory_space<vmem>>, vector<24x32xf32>
    tpu.vector_store %arg6[%c0_14, %c0_15], %31 {strides = array<i32>} : memref<24x32xf32, #tpu.memory_space<vmem>>, vector<24x32xf32>,
    %33 = vector.extract_strided_slice %28 {offsets = [0, 64], sizes = [24, 32], strides = [1, 1]} : vector<24x96xf32> to vector<24x32xf32>
    %c0_16 = arith.constant 0 : index
    %c0_17 = arith.constant 0 : index
    %34 = vector.load %arg7[%c0_16, %c0_17] : memref<24x32xf32, #tpu.memory_space<vmem>>, vector<24x32xf32>
    tpu.vector_store %arg7[%c0_16, %c0_17], %33 {strides = array<i32>} : memref<24x32xf32, #tpu.memory_space<vmem>>, vector<24x32xf32>,
    return
  }
  func.func @transform_0(%arg0: i32) -> (i32, i32) {
    %c0_i32 = arith.constant 0 : i32
    %c0_i32_0 = arith.constant 0 : i32
    return %arg0, %c0_i32 : i32, i32
  }
  func.func @transform_1(%arg0: i32) -> (i32, i32) {
    %c0_i32 = arith.constant 0 : i32
    %c0_i32_0 = arith.constant 0 : i32
    %c0_i32_1 = arith.constant 0 : i32
    return %c0_i32, %c0_i32_0 : i32, i32
  }
  func.func @transform_2(%arg0: i32) -> (i32, i32) {
    %c0_i32 = arith.constant 0 : i32
    %c0_i32_0 = arith.constant 0 : i32
    %c0_i32_1 = arith.constant 0 : i32
    return %c0_i32, %c0_i32_0 : i32, i32
  }
  func.func @transform_3(%arg0: i32) -> (i32, i32) {
    %c0_i32 = arith.constant 0 : i32
    %c0_i32_0 = arith.constant 0 : i32
    %c0_i32_1 = arith.constant 0 : i32
    return %c0_i32, %c0_i32_0 : i32, i32
  }
  func.func @transform_4(%arg0: i32) -> (i32, i32) {
    %c0_i32 = arith.constant 0 : i32
    %c0_i32_0 = arith.constant 0 : i32
    return %arg0, %c0_i32 : i32, i32
  }
  func.func @transform_5(%arg0: i32) -> (i32, i32) {
    %c0_i32 = arith.constant 0 : i32
    %c0_i32_0 = arith.constant 0 : i32
    return %arg0, %c0_i32 : i32, i32
  }
  func.func @transform_6(%arg0: i32) -> (i32, i32) {
    %c0_i32 = arith.constant 0 : i32
    %c0_i32_0 = arith.constant 0 : i32
    return %arg0, %c0_i32 : i32, i32
  }
}

</mosaic_0001>

<llo_original>
// kernel: tpu_custom_call.1
$region0: #{tpu_custom_call.1}
  #allocation0 [shape = 'u32[]', space=smem, size = 0x4, offset = 0x4, fixed_abs, tag = 'smem constant byte address 0x4 - core index']
  #allocation1 [shape = 'u32[144,128]{1,0:T(1,128)}', space=vmem, size = 0x12000, scoped, tag = 'internal scratch']
  %s0 = inlined_call_operand.vmem [shape: f32[48,32], index: 0, kind: input, shape index: {}]
  %s1 = inlined_call_operand.vmem [shape: f32[2,32], index: 1, kind: input, shape index: {}]
  %s2 = inlined_call_operand.vmem [shape: f32[1,96], index: 2, kind: input, shape index: {}]
  %s3 = inlined_call_operand.vmem [shape: f32[32,96], index: 3, kind: input, shape index: {}]
  %s4 = inlined_call_operand.vmem [shape: f32[48,32], index: 4, kind: output, shape index: {0}]
  %s5 = inlined_call_operand.vmem [shape: f32[48,32], index: 5, kind: output, shape index: {1}]
  %s6 = inlined_call_operand.vmem [shape: f32[48,32], index: 6, kind: output, shape index: {2}]
  %7 = xla_tuple %s4, %s5, %s6
  %s8 = sld [smem:[#allocation0]]
  $region65: #{tpu_custom_call.1} parent=0
    _
  %s10 = ssub.s32 1, %s8
  %s11 = scalar_select 0, %s10, %s8
  loop: start=0, step=1, limit=4
  $region2: #{tpu_custom_call.1} parent=0 // loop_pre_header
    _
  $region3: #{tpu_custom_call.1} parent=0 // loop_header
    %s13 = sphi 0, %s17
    %p14 = scmp.ge.s32.totalorder %s13, 4
    %s23 = sphi 0, %s25
    %s26 = sphi 0, %s23
    %s27 = sphi 0, %s26
    %s43 = sphi 0, %s27
    %s47 = sphi 0, %s47
    %s49 = sphi 0, %s47
    %s50 = sphi 0, %s49
    %s64 = sphi 0, %s50
    %s68 = sphi 0, %s68
    %s70 = sphi 0, %s68
    %s71 = sphi 0, %s70
    %s85 = sphi 0, %s71
    %s89 = sphi 0, %s89
    %s91 = sphi 0, %s89
    %s92 = sphi 0, %s91
    %s106 = sphi 0, %s92
    %s112 = sphi 0, %s114
    %s115 = sphi 0, %s112
    %s116 = sphi 0, %s115
    %s132 = sphi 0, %s116
    %s138 = sphi 0, %s140
    %s141 = sphi 0, %s138
    %s142 = sphi 0, %s141
    %s158 = sphi 0, %s142
    %s164 = sphi 0, %s166
    %s167 = sphi 0, %s164
    %s168 = sphi 0, %s167
    %s184 = sphi 0, %s168
  $region4: #{tpu_custom_call.1} parent=0 // loop_header_branch
    %16 = sbr.rel (%p14) target = $region8
  $region5: #{tpu_custom_call.1} parent=0 // loop_body
    %s18 = ssub.s32 %s13, 1
    %s19 = ssub.s32 %s13, 2
    %s20 = sadd.s32 %s13, 1
    %s21 = ssub.s32 %s13, %s20
    %p22 = scmp.eq.s32.totalorder %s21, 0
    %s24 = sadd.s32 %s23, 1
    %s25 = scalar_select %p22, %s23, %s24
    %p28 = pneg %p22
    %p29 = scmp.eq.s32.totalorder %s13, 1
    %p30 = por %p28, %p29
    %p31 = scmp.ne.s32.totalorder %s23, %s26
    %p32 = scmp.eq.s32.totalorder %s13, 0
    %p33 = por %p31, %p32
    %p34 = scmp.ne.s32.totalorder %s23, %s26
    %p35 = scmp.eq.s32.totalorder %s18, 1
    %p36 = por %p34, %p35
    %p37 = scmp.ne.s32.totalorder %s26, %s27
    %p38 = scmp.eq.s32.totalorder %s18, 0
    %p39 = por %p37, %p38
    %p40 = scmp.ne.s32.totalorder %s26, %s27
    %p41 = scmp.eq.s32.totalorder %s19, 1
    %p42 = por %p40, %p41
    %p44 = scmp.ne.s32.totalorder %s27, %s43
    %p45 = scmp.eq.s32.totalorder %s19, 0
    %p46 = por %p44, %p45
    %s48 = sadd.s32 %s47, 1
    %p51 = scmp.eq.s32.totalorder %s13, 1
    %p52 = scmp.ne.s32.totalorder %s47, %s49
    %p53 = scmp.eq.s32.totalorder %s13, 0
    %p54 = por %p52, %p53
    %p55 = scmp.ne.s32.totalorder %s47, %s49
    %p56 = scmp.eq.s32.totalorder %s18, 1
    %p57 = por %p55, %p56
    %p58 = scmp.ne.s32.totalorder %s49, %s50
    %p59 = scmp.eq.s32.totalorder %s18, 0
    %p60 = por %p58, %p59
    %p61 = scmp.ne.s32.totalorder %s49, %s50
    %p62 = scmp.eq.s32.totalorder %s19, 1
    %p63 = por %p61, %p62
    %p65 = scmp.ne.s32.totalorder %s50, %s64
    %p66 = scmp.eq.s32.totalorder %s19, 0
    %p67 = por %p65, %p66
    %s69 = sadd.s32 %s68, 1
    %p72 = scmp.eq.s32.totalorder %s13, 1
    %p73 = scmp.ne.s32.totalorder %s68, %s70
    %p74 = scmp.eq.s32.totalorder %s13, 0
    %p75 = por %p73, %p74
    %p76 = scmp.ne.s32.totalorder %s68, %s70
    %p77 = scmp.eq.s32.totalorder %s18, 1
    %p78 = por %p76, %p77
    %p79 = scmp.ne.s32.totalorder %s70, %s71
    %p80 = scmp.eq.s32.totalorder %s18, 0
    %p81 = por %p79, %p80
    %p82 = scmp.ne.s32.totalorder %s70, %s71
    %p83 = scmp.eq.s32.totalorder %s19, 1
    %p84 = por %p82, %p83
    %p86 = scmp.ne.s32.totalorder %s71, %s85
    %p87 = scmp.eq.s32.totalorder %s19, 0
    %p88 = por %p86, %p87
    %s90 = sadd.s32 %s89, 1
    %p93 = scmp.eq.s32.totalorder %s13, 1
    %p94 = scmp.ne.s32.totalorder %s89, %s91
    %p95 = scmp.eq.s32.totalorder %s13, 0
    %p96 = por %p94, %p95
    %p97 = scmp.ne.s32.totalorder %s89, %s91
    %p98 = scmp.eq.s32.totalorder %s18, 1
    %p99 = por %p97, %p98
    %p100 = scmp.ne.s32.totalorder %s91, %s92
    %p101 = scmp.eq.s32.totalorder %s18, 0
    %p102 = por %p100, %p101
    %p103 = scmp.ne.s32.totalorder %s91, %s92
    %p104 = scmp.eq.s32.totalorder %s19, 1
    %p105 = por %p103, %p104
    %p107 = scmp.ne.s32.totalorder %s92, %s106
    %p108 = scmp.eq.s32.totalorder %s19, 0
    %p109 = por %p107, %p108
    %s110 = ssub.s32 %s13, %s20
    %p111 = scmp.eq.s32.totalorder %s110, 0
    %s113 = sadd.s32 %s112, 1
    %s114 = scalar_select %p111, %s112, %s113
    %p117 = pneg %p111
    %p118 = scmp.eq.s32.totalorder %s13, 1
    %p119 = por %p117, %p118
    %p120 = scmp.ne.s32.totalorder %s112, %s115
    %p121 = scmp.eq.s32.totalorder %s13, 0
    %p122 = por %p120, %p121
    %p123 = scmp.ne.s32.totalorder %s112, %s115
    %p124 = scmp.eq.s32.totalorder %s18, 1
    %p125 = por %p123, %p124
    %p126 = scmp.ne.s32.totalorder %s115, %s116
    %p127 = scmp.eq.s32.totalorder %s18, 0
    %p128 = por %p126, %p127
    %p129 = scmp.ne.s32.totalorder %s115, %s116
    %p130 = scmp.eq.s32.totalorder %s19, 1
    %p131 = por %p129, %p130
    %p133 = scmp.ne.s32.totalorder %s116, %s132
    %p134 = scmp.eq.s32.totalorder %s19, 0
    %p135 = por %p133, %p134
    %s136 = ssub.s32 %s13, %s20
    %p137 = scmp.eq.s32.totalorder %s136, 0
    %s139 = sadd.s32 %s138, 1
    %s140 = scalar_select %p137, %s138, %s139
    %p143 = pneg %p137
    %p144 = scmp.eq.s32.totalorder %s13, 1
    %p145 = por %p143, %p144
    %p146 = scmp.ne.s32.totalorder %s138, %s141
    %p147 = scmp.eq.s32.totalorder %s13, 0
    %p148 = por %p146, %p147
    %p149 = scmp.ne.s32.totalorder %s138, %s141
    %p150 = scmp.eq.s32.totalorder %s18, 1
    %p151 = por %p149, %p150
    %p152 = scmp.ne.s32.totalorder %s141, %s142
    %p153 = scmp.eq.s32.totalorder %s18, 0
    %p154 = por %p152, %p153
    %p155 = scmp.ne.s32.totalorder %s141, %s142
    %p156 = scmp.eq.s32.totalorder %s19, 1
    %p157 = por %p155, %p156
    %p159 = scmp.ne.s32.totalorder %s142, %s158
    %p160 = scmp.eq.s32.totalorder %s19, 0
    %p161 = por %p159, %p160
    %s162 = ssub.s32 %s13, %s20
    %p163 = scmp.eq.s32.totalorder %s162, 0
    %s165 = sadd.s32 %s164, 1
    %s166 = scalar_select %p163, %s164, %s165
    %p169 = pneg %p163
    %p170 = scmp.eq.s32.totalorder %s13, 1
    %p171 = por %p169, %p170
    %p172 = scmp.ne.s32.totalorder %s164, %s167
    %p173 = scmp.eq.s32.totalorder %s13, 0
    %p174 = por %p172, %p173
    %p175 = scmp.ne.s32.totalorder %s164, %s167
    %p176 = scmp.eq.s32.totalorder %s18, 1
    %p177 = por %p175, %p176
    %p178 = scmp.ne.s32.totalorder %s167, %s168
    %p179 = scmp.eq.s32.totalorder %s18, 0
    %p180 = por %p178, %p179
    %p181 = scmp.ne.s32.totalorder %s167, %s168
    %p182 = scmp.eq.s32.totalorder %s19, 1
    %p183 = por %p181, %p182
    %p185 = scmp.ne.s32.totalorder %s168, %s184
    %p186 = scmp.eq.s32.totalorder %s19, 0
    %p187 = por %p185, %p186
    %p188 = scmp.le.s32.totalorder 1, %s13
    %p189 = scmp.lt.s32.totalorder %s13, 3
    %p190 = pnand %p188, %p189
    %p191 = pneg %p190
    // Predicated region
    $region9: #{tpu_custom_call.1} parent=5 // pred_check
      _
    $region10: #{tpu_custom_call.1} parent=5 // pred_check_branch
      %193 = sbr.rel (%p190) target = $region12
    $region11: #{tpu_custom_call.1} parent=5 // pred_region
      %s194 = ssub.s32 %s13, 1
      // Predicated region
      $region13: #{tpu_custom_call.1} parent=11 // pred_check
        %p195 = pneg %p60
      $region14: #{tpu_custom_call.1} parent=11 // pred_check_branch
        %197 = sbr.rel (%p195) target = $region16
      $region15: #{tpu_custom_call.1} parent=11 // pred_region
        _
      $region16: #{tpu_custom_call.1} parent=11 // pred_fallthru
        _
      // Predicated region
      $region17: #{tpu_custom_call.1} parent=11 // pred_check
        %p198 = pneg %p81
      $region18: #{tpu_custom_call.1} parent=11 // pred_check_branch
        %200 = sbr.rel (%p198) target = $region20
      $region19: #{tpu_custom_call.1} parent=11 // pred_region
        _
      $region20: #{tpu_custom_call.1} parent=11 // pred_fallthru
        _
      // Predicated region
      $region21: #{tpu_custom_call.1} parent=11 // pred_check
        %p201 = pneg %p102
      $region22: #{tpu_custom_call.1} parent=11 // pred_check_branch
        %203 = sbr.rel (%p201) target = $region24
      $region23: #{tpu_custom_call.1} parent=11 // pred_region
        _
      $region24: #{tpu_custom_call.1} parent=11 // pred_fallthru
        _
    $region12: #{tpu_custom_call.1} parent=5 // pred_fallthru
      _
    %p204 = scmp.lt.s32.totalorder %s13, 2
    // Predicated region
    $region25: #{tpu_custom_call.1} parent=5 // pred_check
      %p205 = pneg %p204
    $region26: #{tpu_custom_call.1} parent=5 // pred_check_branch
      %207 = sbr.rel (%p205) target = $region28
    $region27: #{tpu_custom_call.1} parent=5 // pred_region
      // Predicated region
      $region29: #{tpu_custom_call.1} parent=27 // pred_check
        %p208 = pneg %p33
      $region30: #{tpu_custom_call.1} parent=27 // pred_check_branch
        %210 = sbr.rel (%p208) target = $region32
      $region31: #{tpu_custom_call.1} parent=27 // pred_region
        %s211 = smul.u32 3, %s13
        %p212 = scmp.lt.s32.totalorder %s211, 5
        %s213 = scalar_select %p212, %s211, 5
        %s214 = smul.addr %s213, 8
        %s215 = scalar_lea.vmem %s0, %s214
        %s216 = smul.u32 3, %s13
      $region32: #{tpu_custom_call.1} parent=27 // pred_fallthru
        _
    $region28: #{tpu_custom_call.1} parent=5 // pred_fallthru
      _
    %p217 = scmp.le.s32.totalorder 1, %s13
    %p218 = scmp.lt.s32.totalorder %s13, 3
    %p219 = pnand %p217, %p218
    %p220 = pneg %p219
    // Predicated region
    $region33: #{tpu_custom_call.1} parent=5 // pred_check
      _
    $region34: #{tpu_custom_call.1} parent=5 // pred_check_branch
      %222 = sbr.rel (%p219) target = $region36
    $region35: #{tpu_custom_call.1} parent=5 // pred_region
      %s223 = ssub.s32 %s13, 1
      %s224 = smul.u32 3, %s18
      %p225 = scmp.lt.s32.totalorder %s224, 5
      %s226 = scalar_select %p225, %s224, 5
      %s227 = smul.addr %s226, 8
      %s228 = scalar_lea.vmem %s0, %s227
      %p229 = pneg %p39
      %p230 = pneg %p36
      %p231 = pneg %p60
      %p232 = pneg %p57
      %p233 = pneg %p81
      %p234 = pneg %p78
      %p235 = pneg %p102
      %p236 = pneg %p99
      %p237 = pneg %p128
      %p238 = pneg %p125
      %s239 = smul.u32 3, %s18
      %p240 = scmp.lt.s32.totalorder %s239, 5
      %s241 = scalar_select %p240, %s239, 5
      %s242 = smul.addr %s241, 8
      %s243 = scalar_lea.vmem %s4, %s242
      %p244 = pneg %p154
      %p245 = pneg %p151
      %s246 = smul.u32 3, %s18
      %p247 = scmp.lt.s32.totalorder %s246, 5
      %s248 = scalar_select %p247, %s246, 5
      %s249 = smul.addr %s248, 8
      %s250 = scalar_lea.vmem %s5, %s249
      %p251 = pneg %p180
      %p252 = pneg %p177
      %s253 = smul.u32 3, %s18
      %p254 = scmp.lt.s32.totalorder %s253, 5
      %s255 = scalar_select %p254, %s253, 5
      %s256 = smul.addr %s255, 8
      %s257 = scalar_lea.vmem %s6, %s256
      %s258 = smul.u32 3, %s18
      %p259 = scmp.lt.s32.totalorder %s258, 5
      %s260 = scalar_select %p259, %s258, 5
      %s261 = smul.addr %s260, 8
      %s262 = scalar_lea.vmem %s0, %s261
      %s263 = smul.u32 3, %s18
      %s264 = smul.u32 3, %s18
      %p265 = scmp.lt.s32.totalorder %s264, 5
      %s266 = scalar_select %p265, %s264, 5
      %s267 = smul.addr %s266, 8
      %s268 = scalar_lea.vmem %s4, %s267
      %s269 = smul.u32 3, %s18
      %s270 = smul.u32 3, %s18
      %p271 = scmp.lt.s32.totalorder %s270, 5
      %s272 = scalar_select %p271, %s270, 5
      %s273 = smul.addr %s272, 8
      %s274 = scalar_lea.vmem %s5, %s273
      %s275 = smul.u32 3, %s18
      %s276 = smul.u32 3, %s18
      %p277 = scmp.lt.s32.totalorder %s276, 5
      %s278 = scalar_select %p277, %s276, 5
      %s279 = smul.addr %s278, 8
      %s280 = scalar_lea.vmem %s6, %s279
      %s281 = smul.u32 3, %s18
      %v282 = vld [vmem:[%s262] sm:$0xff]
      %v283 = vld [vmem:[%s262 + $0x8] sm:$0xff]
      %v284 = vld [vmem:[%s262 + $0x10] sm:$0xff]
      %v285 = vld [vmem:[%s1] sm:$0x3]
      %vm286 = vcmask 261120
      %v287 = vsel %vm286, %v282, 0.0
      %288 = vadd.xlane.f32.xlu0 %v287
      %v289 = vpop.xlane.xlu0 %288
      %v290 = vsel %vm286, %v283, 0.0
      %291 = vadd.xlane.f32.xlu0 %v290
      %v292 = vpop.xlane.xlu0 %291
      %v293 = vsel %vm286, %v284, 0.0
      %294 = vadd.xlane.f32.xlu0 %v293
      %v295 = vpop.xlane.xlu0 %294
      %v296 = vrcp.pop 32.0
      %v297 = vmul.f32 %v289, %v296
      %v298 = vmul.f32 %v292, %v296
      %v299 = vmul.f32 %v295, %v296
      %v300 = vsub.f32 %v282, %v297
      %v301 = vsub.f32 %v283, %v298
      %v302 = vsub.f32 %v284, %v299
      %v303 = vmul.f32 %v300, %v300
      %v304 = vmul.f32 %v301, %v301
      %v305 = vmul.f32 %v302, %v302
      %v306 = vsel %vm286, %v303, 0.0
      %307 = vadd.xlane.f32.xlu0 %v306
      %v308 = vpop.xlane.xlu0 %307
      %v309 = vsel %vm286, %v304, 0.0
      %310 = vadd.xlane.f32.xlu0 %v309
      %v311 = vpop.xlane.xlu0 %310
      %v312 = vsel %vm286, %v305, 0.0
      %313 = vadd.xlane.f32.xlu0 %v312
      %v314 = vpop.xlane.xlu0 %313
      %v315 = vmul.f32 %v308, %v296
      %v316 = vmul.f32 %v311, %v296
      %v317 = vmul.f32 %v314, %v296
      %v318 = vadd.f32 %v315, 1e-05
      %v319 = vadd.f32 %v316, 1e-05
      %v320 = vadd.f32 %v317, 1e-05
      %v321 = vrsqrt.pop %v318
      %v322 = vrsqrt.pop %v319
      %v323 = vrsqrt.pop %v320
      %v324 = vmul.f32 %v300, %v321
      %v325 = vmul.f32 %v301, %v322
      %v326 = vmul.f32 %v302, %v323
      %v327 = vlaneseq
      %v328 = vshrl.u32 %v327, 7
      %v329 = vsub.s32 0, %v328
      %v330 = vrot.slane %v285, %v329
      %v331 = vmul.f32 %v324, %v330
      %v332 = vmul.f32 %v325, %v330
      %v333 = vmul.f32 %v326, %v330
      %v334 = vlaneseq
      %v335 = vshrl.u32 %v334, 7
      %v336 = vsub.s32 1, %v335
      %v337 = vrot.slane %v285, %v336
      %v338 = vadd.f32 %v331, %v337
      %v339 = vadd.f32 %v332, %v337
      %v340 = vadd.f32 %v333, %v337
      %v341 = vld [vmem:[%s3] sm:$0xff]
      %v342 = vld [vmem:[%s3 + $0x8] sm:$0xff]
      %v343 = vld [vmem:[%s3 + $0x10] sm:$0xff]
      %v344 = vld [vmem:[%s3 + $0x18] sm:$0xff]
      %v345 = vld [vmem:[%s2] sm:$0x1]
      %v347 = vlaneseq
      %v348 = vshrl.u32 %v347, 7
      %v349 = vsub.s32 0, %v348
      %v350 = vrot.slane %v345, %v349
      %v353 = vsel %vm286, %v338, 0
      %v356 = vsel %vm286, %v339, 0
      %v359 = vsel %vm286, %v340, 0
      %361 = vmatprep.subr.mxu0 0.0
      %362 = vmatpush1.msra.mxu0 %v341
      %363 = vmatprep.subr.mxu0 0.0
      %364 = vmatpush1.msra.mxu0 %v342
      %365 = vmatprep.subr.mxu0 0.0
      %366 = vmatpush1.msra.mxu0 %v343
      %367 = vmatprep.subr.mxu0 0.0
      %368 = vmatpush1.msra.mxu0 %v344
      %369 = vmatprep.subr.mxu0 0.0
      %370 = vmatpush1.msra.mxu0 0.0
      %371 = vmatprep.subr.mxu0 0.0
      %372 = vmatpush1.msra.mxu0 0.0
      %373 = vmatprep.subr.mxu0 0.0
      %374 = vmatpush1.msra.mxu0 0.0
      %375 = vmatprep.subr.mxu0 0.0
      %376 = vmatpush1.msra.mxu0 0.0
      %377 = vmatprep.subr.mxu0 0.0
      %378 = vmatpush1.msra.mxu0 0.0
      %379 = vmatprep.subr.mxu0 0.0
      %380 = vmatpush1.msra.mxu0 0.0
      %381 = vmatprep.subr.mxu0 0.0
      %382 = vmatpush1.msra.mxu0 0.0
      %383 = vmatprep.subr.mxu0 0.0
      %384 = vmatpush1.msra.mxu0 0.0
      %385 = vmatprep.subr.mxu0 0.0
      %386 = vmatpush1.msra.mxu0 0.0
      %387 = vmatprep.subr.mxu0 0.0
      %388 = vmatpush1.msra.mxu0 0.0
      %389 = vmatprep.subr.mxu0 0.0
      %390 = vmatpush1.msra.mxu0 0.0
      %391 = vmatprep.subr.mxu0 0.0
      %392 = vmatpush1.msra.mxu0 0.0
      %393 = vmatprep.subr.mxu0 0.0
      %394 = vmatpush1.msra.mxu0 0.0
      %395 = vmatprep.subr.mxu0 0.0
      %396 = vmatpush1.msra.mxu0 0.0
      %397 = vmatprep.subr.mxu0 0.0
      %398 = vmatpush1.msra.mxu0 0.0
      %399 = vmatprep.subr.mxu0 0.0
      %400 = vmatpush1.msra.mxu0 0.0
      %401 = vmatprep.subr.mxu0 0.0
      %402 = vmatpush1.msra.mxu0 0.0
      %403 = vmatprep.subr.mxu0 0.0
      %404 = vmatpush1.msra.mxu0 0.0
      %405 = vmatprep.subr.mxu0 0.0
      %406 = vmatpush1.msra.mxu0 0.0
      %407 = vmatprep.subr.mxu0 0.0
      %408 = vmatpush1.msra.mxu0 0.0
      %409 = vmatprep.subr.mxu0 0.0
      %410 = vmatpush1.msra.mxu0 0.0
      %411 = vmatprep.subr.mxu0 0.0
      %412 = vmatpush1.msra.mxu0 0.0
      %413 = vmatprep.subr.mxu0 0.0
      %414 = vmatpush1.msra.mxu0 0.0
      %415 = vmatprep.subr.mxu0 0.0
      %416 = vmatpush1.msra.mxu0 0.0
      %417 = vmatprep.subr.mxu0 0.0
      %418 = vmatpush1.msra.mxu0 0.0
      %419 = vmatprep.subr.mxu0 0.0
      %420 = vmatpush1.msra.mxu0 0.0
      %421 = vmatprep.subr.mxu0 0.0
      %422 = vmatpush1.msra.mxu0 0.0
      %423 = vmatprep.subr.mxu0 0.0
      %424 = vmatpush1.msra.mxu0 0.0
      %425 = vmatprep.mubr.f32.mxu0 0.0
      %426 = vmatmul.mubr.f32.gmra.mrb[0].mxu0 %v353
      %v427 = vpop.f32.mrb[0].mxu0
      %v428 = vadd.f32 %v350, %v427
      %v429 = vpop.f32.mrb[0].mxu0
      %430 = vmatprep.mubr.f32.mxu0 0.0
      %431 = vmatmul.mubr.f32.gmra.mrb[0].mxu0 %v356
      %v432 = vpop.f32.mrb[0].mxu0
      %v433 = vadd.f32 %v350, %v432
      %v434 = vpop.f32.mrb[0].mxu0
      %435 = vmatprep.mubr.f32.mxu0 0.0
      %436 = vmatmul.mubr.f32.gmra.mrb[0].mxu0 %v359
      %v437 = vpop.f32.mrb[0].mxu0
      %v438 = vadd.f32 %v350, %v437
      %v439 = vpop.f32.mrb[0].mxu0
      %440 = vdwg.mxu0
      %441 = vst.msk [vmem:[%s268] sm:$0xff] %vm286, %v428
      %442 = vst.msk [vmem:[%s268 + $0x8] sm:$0xff] %vm286, %v433
      %443 = vst.msk [vmem:[%s268 + $0x10] sm:$0xff] %vm286, %v438
      %447 = vrot.lane.b32.xlu0 %v428, 96
      %v448 = vpop.permute.xlu0 %447
      %449 = vrot.lane.b32.xlu0 %v433, 96
      %v450 = vpop.permute.xlu0 %449
      %451 = vrot.lane.b32.xlu0 %v438, 96
      %v452 = vpop.permute.xlu0 %451
      %456 = vst.msk [vmem:[%s274] sm:$0xff] %vm286, %v448
      %457 = vst.msk [vmem:[%s274 + $0x8] sm:$0xff] %vm286, %v450
      %458 = vst.msk [vmem:[%s274 + $0x10] sm:$0xff] %vm286, %v452
      %459 = vrot.lane.b32.xlu0 %v428, 64
      %v460 = vpop.permute.xlu0 %459
      %461 = vrot.lane.b32.xlu0 %v433, 64
      %v462 = vpop.permute.xlu0 %461
      %463 = vrot.lane.b32.xlu0 %v438, 64
      %v464 = vpop.permute.xlu0 %463
      %468 = vst.msk [vmem:[%s280] sm:$0xff] %vm286, %v460
      %469 = vst.msk [vmem:[%s280 + $0x8] sm:$0xff] %vm286, %v462
      %470 = vst.msk [vmem:[%s280 + $0x10] sm:$0xff] %vm286, %v464
      %s471 = smul.u32 3, %s18
      %p472 = scmp.lt.s32.totalorder %s471, 5
      %s473 = scalar_select %p472, %s471, 5
      %s474 = smul.addr %s473, 8
      %s475 = scalar_lea.vmem %s4, %s474
      %s476 = smul.u32 3, %s18
      %p477 = scmp.lt.s32.totalorder %s476, 5
      %s478 = scalar_select %p477, %s476, 5
      %s479 = smul.addr %s478, 8
      %s480 = scalar_lea.vmem %s5, %s479
      %s481 = smul.u32 3, %s18
      %p482 = scmp.lt.s32.totalorder %s481, 5
      %s483 = scalar_select %p482, %s481, 5
      %s484 = smul.addr %s483, 8
      %s485 = scalar_lea.vmem %s6, %s484
      // Predicated region
      $region37: #{tpu_custom_call.1} parent=35 // pred_check
        %p486 = pneg %p125
      $region38: #{tpu_custom_call.1} parent=35 // pred_check_branch
        %488 = sbr.rel (%p486) target = $region40
      $region39: #{tpu_custom_call.1} parent=35 // pred_region
        %s489 = smul.u32 3, %s18
      $region40: #{tpu_custom_call.1} parent=35 // pred_fallthru
        _
      // Predicated region
      $region41: #{tpu_custom_call.1} parent=35 // pred_check
        %p490 = pneg %p151
      $region42: #{tpu_custom_call.1} parent=35 // pred_check_branch
        %492 = sbr.rel (%p490) target = $region44
      $region43: #{tpu_custom_call.1} parent=35 // pred_region
        %s493 = smul.u32 3, %s18
      $region44: #{tpu_custom_call.1} parent=35 // pred_fallthru
        _
      // Predicated region
      $region45: #{tpu_custom_call.1} parent=35 // pred_check
        %p494 = pneg %p177
      $region46: #{tpu_custom_call.1} parent=35 // pred_check_branch
        %496 = sbr.rel (%p494) target = $region48
      $region47: #{tpu_custom_call.1} parent=35 // pred_region
        %s497 = smul.u32 3, %s18
      $region48: #{tpu_custom_call.1} parent=35 // pred_fallthru
        _
    $region36: #{tpu_custom_call.1} parent=5 // pred_fallthru
      _
    %p498 = scmp.le.s32.totalorder 2, %s13
    // Predicated region
    $region49: #{tpu_custom_call.1} parent=5 // pred_check
      %p499 = pneg %p498
    $region50: #{tpu_custom_call.1} parent=5 // pred_check_branch
      %501 = sbr.rel (%p499) target = $region52
    $region51: #{tpu_custom_call.1} parent=5 // pred_region
      %s502 = ssub.s32 %s13, 2
      // Predicated region
      $region53: #{tpu_custom_call.1} parent=51 // pred_check
        %p503 = pneg %p131
      $region54: #{tpu_custom_call.1} parent=51 // pred_check_branch
        %505 = sbr.rel (%p503) target = $region56
      $region55: #{tpu_custom_call.1} parent=51 // pred_region
        %s506 = smul.u32 3, %s19
        %p507 = scmp.lt.s32.totalorder %s506, 5
        %s508 = scalar_select %p507, %s506, 5
        %s509 = smul.addr %s508, 8
        %s510 = scalar_lea.vmem %s4, %s509
      $region56: #{tpu_custom_call.1} parent=51 // pred_fallthru
        _
      // Predicated region
      $region57: #{tpu_custom_call.1} parent=51 // pred_check
        %p511 = pneg %p157
      $region58: #{tpu_custom_call.1} parent=51 // pred_check_branch
        %513 = sbr.rel (%p511) target = $region60
      $region59: #{tpu_custom_call.1} parent=51 // pred_region
        %s514 = smul.u32 3, %s19
        %p515 = scmp.lt.s32.totalorder %s514, 5
        %s516 = scalar_select %p515, %s514, 5
        %s517 = smul.addr %s516, 8
        %s518 = scalar_lea.vmem %s5, %s517
      $region60: #{tpu_custom_call.1} parent=51 // pred_fallthru
        _
      // Predicated region
      $region61: #{tpu_custom_call.1} parent=51 // pred_check
        %p519 = pneg %p183
      $region62: #{tpu_custom_call.1} parent=51 // pred_check_branch
        %521 = sbr.rel (%p519) target = $region64
      $region63: #{tpu_custom_call.1} parent=51 // pred_region
        %s522 = smul.u32 3, %s19
        %p523 = scmp.lt.s32.totalorder %s522, 5
        %s524 = scalar_select %p523, %s522, 5
        %s525 = smul.addr %s524, 8
        %s526 = scalar_lea.vmem %s6, %s525
      $region64: #{tpu_custom_call.1} parent=51 // pred_fallthru
        _
    $region52: #{tpu_custom_call.1} parent=5 // pred_fallthru
      _
  $region6: #{tpu_custom_call.1} parent=0 // loop_footer
    %s17 = sadd.s32 1, %s13
  $region7: #{tpu_custom_call.1} parent=0 // loop_footer_branch
    %12 = sbr.rel target = $region3
  $region8: #{tpu_custom_call.1} parent=0 // loop_exit
    _

</llo_original>
